<compile_context>
chip_gen: v5e
topology: v5e:2x2
jax: 0.10.0
libtpu: 0.0.40
codegen_flags: <defaults>
</compile_context>

<pallas_src>
import functools

import jax
import jax.numpy as jnp
from jax import lax
from jax.experimental import pallas as pl
from jax.experimental.pallas import tpu as pltpu


def _mlp_higgs_kernel(x_ref,
                      w1_ref, b1_ref,
                      w2_ref, b2_ref,
                      w3_ref, b3_ref,
                      w4_ref, b4_ref,
                      w5t_ref, b5_ref,
                      o_ref, *, compute_dtype, tanh_dtype):
    """Fused 5-layer MLP on one batch tile.

    x_ref:   [tile_b, D_in]  (native torch layout; cast + transposed contraction
                              happens on the MXU, batch ends up on lanes)
    w{1..4}: [out, in]        matmul weights in compute_dtype (bf16 by default)
    w5t_ref: [H4, 1]          final layer weights (f32) for the VPU reduce
    b*_ref:  [out, 1]         f32 biases, lane-broadcast
    o_ref:   [1, tile_b]      lane-dense sigmoid output (f32)
    """
    cdt = compute_dtype

    # Layer 1: W1 @ x^T via dot_general contracting the feature axis of both
    # operands -> [H, tile_b].  f32 accumulation, f32 bias.
    x_tile = x_ref[...].astype(cdt)
    pre = lax.dot_general(
        w1_ref[...], x_tile,
        dimension_numbers=(((1,), (1,)), ((), ())),
        preferred_element_type=jnp.float32) + b1_ref[...]
    h = jnp.tanh(pre.astype(tanh_dtype))

    # Hidden layers 2..4 (weight-stationary W @ h, batch stays on lanes).
    for w_ref, b_ref in ((w2_ref, b2_ref), (w3_ref, b3_ref), (w4_ref, b4_ref)):
        pre = jnp.dot(w_ref[...], h.astype(cdt),
                      preferred_element_type=jnp.float32) + b_ref[...]
        h = jnp.tanh(pre.astype(tanh_dtype))

    # Final [1, 16] layer on the VPU + a 16-sublane XLU reduce instead of an
    # MXU push/drain for a 1x16 matmul.  w5t is f32 -> f32 multiply/accumulate.
    logits = jnp.sum(w5t_ref[...] * h, axis=0, keepdims=True) + b5_ref[...]

    # sigmoid(z) == 0.5 * (tanh(0.5 z) + 1): one EUP op.
    o_ref[...] = (0.5 * (jnp.tanh(0.5 * logits) + 1.0)).astype(o_ref.dtype)


def mlp_higgs_forward(x, params, *, tile_b=2048,
                      compute_dtype=jnp.bfloat16,
                      tanh_dtype=jnp.float32):
    """Forward pass matching torch MLP_Higgs.

    x:             [B, D_in] float32 (torch layout).
    params:        list of (W[out, in], b[out]) pairs (torch nn.Linear layout).
    tile_b:        batch tile (lane axis); multiple of 128.  Automatically
                   capped at the 128-rounded batch size.  2048 is safe for the
                   default scoped VMEM on v5e/v6e/v7x; raise to 4096-8192 for
                   very large B (still fine, ~1-2 MiB of VMEM).
    compute_dtype: MXU operand dtype.  bf16 is native on all generations and
                   the default; pass jnp.float32 for a bit-faithful path.
    tanh_dtype:    activation dtype for the hidden tanh.  Keep f32 on v5e
                   (no bf16 EUP); jnp.bfloat16 is a small win on v6e/v7x.
    Returns [B, D_out] float32 probabilities.
    """
    B, D_in = x.shape
    D_out = params[-1][0].shape[0]
    assert tile_b % 128 == 0, "tile_b must be a multiple of 128 (lane width)"

    # Cap the tile at the 128-rounded batch so small batches don't pay for
    # padded work, then pad the batch up to a whole number of tiles.
    b_rounded = -(-B // 128) * 128
    eff_tile = min(tile_b, b_rounded)
    n_tiles = -(-B // eff_tile)
    b_pad = n_tiles * eff_tile
    x_in = jnp.pad(x, ((0, b_pad - B), (0, 0))) if b_pad != B else x
    # NOTE: x stays f32 in HBM and is cast to compute_dtype inside the kernel;
    # a wrapper-side cast would cost an extra HBM read+write pass over x.

    flat = []
    n_layers = len(params)
    for li, (w, b) in enumerate(params):
        if li < n_layers - 1:
            flat.append(w.astype(compute_dtype))              # [out, in] for MXU
        else:
            flat.append(w.T.astype(jnp.float32))              # [H4, D_out] for VPU reduce
        flat.append(b.reshape(-1, 1).astype(jnp.float32))     # [out, 1] f32 bias

    # x tiled along the batch axis; weights/biases are single full blocks with
    # a constant index_map (fetched once, resident across the grid).
    in_specs = [pl.BlockSpec((eff_tile, D_in), lambda i: (i, 0))]
    in_specs += [pl.BlockSpec(a.shape, lambda i: (0, 0)) for a in flat]
    out_spec = pl.BlockSpec((D_out, eff_tile), lambda i: (0, i))

    kernel = functools.partial(_mlp_higgs_kernel,
                               compute_dtype=compute_dtype,
                               tanh_dtype=tanh_dtype)

    out_t = pl.pallas_call(
        kernel,
        out_shape=jax.ShapeDtypeStruct((D_out, b_pad), jnp.float32),
        grid_spec=pltpu.PrefetchScalarGridSpec(
            num_scalar_prefetch=0,
            grid=(n_tiles,),
            in_specs=in_specs,
            out_specs=out_spec,
        ),
        compiler_params=pltpu.CompilerParams(
            dimension_semantics=("parallel",)),
    )(x_in, *flat)

    # Back to torch layout [B, D_out] (one dim is 1: effectively a reshape).
    return out_t[:, :B].T


def init_params(key, D_in, H, H2, D_out):
    """torch.nn.Linear-style init: W[out, in], b[out], uniform +/- 1/sqrt(fan_in)."""
    dims = [(D_in, H), (H, H2), (H2, H2), (H2, H2 // 2), (H2 // 2, D_out)]
    params = []
    for fan_in, fan_out in dims:
        key, kw, kb = jax.random.split(key, 3)
        bound = 1.0 / jnp.sqrt(jnp.float32(fan_in))
        w = jax.random.uniform(kw, (fan_out, fan_in), jnp.float32, -bound, bound)
        b = jax.random.uniform(kb, (fan_out,), jnp.float32, -bound, bound)
        params.append((w, b))
    return params


def mlp_higgs_ref(x, params):
    h = x
    for i, (w, b) in enumerate(params):
        h = h @ w.T + b
        if i < len(params) - 1:
            h = jnp.tanh(h)
    return jax.nn.sigmoid(h)


if __name__ == "__main__":
    # Higgs-like shapes: 28 input features, H=64, H2=32, D_out=1.
    D_in, H, H2, D_out = 28, 64, 32, 1
    B = 256   # small test batch; tile auto-caps to 256 (one 128-aligned tile)

    key = jax.random.PRNGKey(0)
    key, kx = jax.random.split(key)
    x = jax.random.normal(kx, (B, D_in), jnp.float32)
    params = init_params(key, D_in, H, H2, D_out)

    ref = mlp_higgs_ref(x, params)

    # Default path: bf16 MXU operands, f32 accumulation / bias / tanh.
    out_bf16 = jax.block_until_ready(mlp_higgs_forward(x, params))
    assert out_bf16.shape == (B, D_out)
    assert float(jnp.max(jnp.abs(out_bf16 - ref))) < 5e-2, "bf16 mismatch vs reference"

    # f32-operand path (bit-faithful check against the JAX reference).
    out_f32 = jax.block_until_ready(
        mlp_higgs_forward(x, params, compute_dtype=jnp.float32))
    assert out_f32.shape == (B, D_out)
    assert jnp.allclose(out_f32, ref, atol=1e-5, rtol=1e-5), "f32 mismatch vs reference"

    # bf16-tanh variant (v6e/v7x EUP optimization); looser tolerance.
    out_bt = jax.block_until_ready(
        mlp_higgs_forward(x, params, tanh_dtype=jnp.bfloat16))
    assert float(jnp.max(jnp.abs(out_bt - ref))) < 5e-2, "bf16-tanh mismatch vs reference"

    print("KERNEL_OK")
</pallas_src>

<mosaic_0001>
module attributes {stable_mosaic.version = 11 : i64} {
  func.func @_mlp_higgs_kernel(%arg0: i32, %arg1: memref<256x28xf32, #tpu.memory_space<vmem>>, %arg2: memref<64x28xbf16, #tpu.memory_space<vmem>>, %arg3: memref<64x1xf32, #tpu.memory_space<vmem>>, %arg4: memref<32x64xbf16, #tpu.memory_space<vmem>>, %arg5: memref<32x1xf32, #tpu.memory_space<vmem>>, %arg6: memref<32x32xbf16, #tpu.memory_space<vmem>>, %arg7: memref<32x1xf32, #tpu.memory_space<vmem>>, %arg8: memref<16x32xbf16, #tpu.memory_space<vmem>>, %arg9: memref<16x1xf32, #tpu.memory_space<vmem>>, %arg10: memref<16x1xf32, #tpu.memory_space<vmem>>, %arg11: memref<1x1xf32, #tpu.memory_space<vmem>>, %arg12: memref<1x256xf32, #tpu.memory_space<vmem>>) attributes {dimension_semantics = [#tpu.dimension_semantics<parallel>], iteration_bounds = array<i64: 1>, scalar_prefetch = 0 : i64, scratch_operands = 0 : i64, tpu.core_type = #tpu.core_type<tc>, window_params = [{transform_indices = @transform_0, window_bounds = array<i64: 256, 28>}, {pipeline_mode = #tpu.pipeline_mode<synchronous>, transform_indices = @transform_1, window_bounds = array<i64: 64, 28>}, {pipeline_mode = #tpu.pipeline_mode<synchronous>, transform_indices = @transform_2, window_bounds = array<i64: 64, 1>}, {pipeline_mode = #tpu.pipeline_mode<synchronous>, transform_indices = @transform_3, window_bounds = array<i64: 32, 64>}, {pipeline_mode = #tpu.pipeline_mode<synchronous>, transform_indices = @transform_4, window_bounds = array<i64: 32, 1>}, {pipeline_mode = #tpu.pipeline_mode<synchronous>, transform_indices = @transform_5, window_bounds = array<i64: 32, 32>}, {pipeline_mode = #tpu.pipeline_mode<synchronous>, transform_indices = @transform_6, window_bounds = array<i64: 32, 1>}, {pipeline_mode = #tpu.pipeline_mode<synchronous>, transform_indices = @transform_7, window_bounds = array<i64: 16, 32>}, {pipeline_mode = #tpu.pipeline_mode<synchronous>, transform_indices = @transform_8, window_bounds = array<i64: 16, 1>}, {pipeline_mode = #tpu.pipeline_mode<synchronous>, transform_indices = @transform_9, window_bounds = array<i64: 16, 1>}, {pipeline_mode = #tpu.pipeline_mode<synchronous>, transform_indices = @transform_10, window_bounds = array<i64: 1, 1>}, {transform_indices = @transform_11, window_bounds = array<i64: 1, 256>}]} {
    %c0 = arith.constant 0 : index
    %c0_0 = arith.constant 0 : index
    %0 = vector.load %arg1[%c0, %c0_0] : memref<256x28xf32, #tpu.memory_space<vmem>>, vector<256x28xf32>
    %1 = arith.truncf %0 : vector<256x28xf32> to vector<256x28xbf16>
    %c0_1 = arith.constant 0 : index
    %c0_2 = arith.constant 0 : index
    %2 = vector.load %arg2[%c0_1, %c0_2] : memref<64x28xbf16, #tpu.memory_space<vmem>>, vector<64x28xbf16>
    %cst = arith.constant dense<0.000000e+00> : vector<64x256xf32>
    %3 = tpu.matmul %2, %1, %cst {dimension_numbers = #tpu.dot_dimension_numbers<[1], [1], [0], [0], [0, 0, 1, 0], [], []>} : vector<64x28xbf16>, vector<256x28xbf16>, vector<64x256xf32> -> vector<64x256xf32>
    %c0_3 = arith.constant 0 : index
    %c0_4 = arith.constant 0 : index
    %4 = vector.load %arg3[%c0_3, %c0_4] : memref<64x1xf32, #tpu.memory_space<vmem>>, vector<64x1xf32>
    %5 = vector.broadcast %4 : vector<64x1xf32> to vector<64x256xf32>
    %6 = arith.addf %3, %5 : vector<64x256xf32>
    %7 = math.tanh %6 : vector<64x256xf32>
    %c0_5 = arith.constant 0 : index
    %c0_6 = arith.constant 0 : index
    %8 = vector.load %arg4[%c0_5, %c0_6] : memref<32x64xbf16, #tpu.memory_space<vmem>>, vector<32x64xbf16>
    %9 = arith.truncf %7 : vector<64x256xf32> to vector<64x256xbf16>
    %cst_7 = arith.constant dense<0.000000e+00> : vector<32x256xf32>
    %10 = tpu.matmul %8, %9, %cst_7 {dimension_numbers = #tpu.dot_dimension_numbers<[1], [0], [0], [1], [0, 0, 1, 1], [], []>} : vector<32x64xbf16>, vector<64x256xbf16>, vector<32x256xf32> -> vector<32x256xf32>
    %c0_8 = arith.constant 0 : index
    %c0_9 = arith.constant 0 : index
    %11 = vector.load %arg5[%c0_8, %c0_9] : memref<32x1xf32, #tpu.memory_space<vmem>>, vector<32x1xf32>
    %12 = vector.broadcast %11 : vector<32x1xf32> to vector<32x256xf32>
    %13 = arith.addf %10, %12 : vector<32x256xf32>
    %14 = math.tanh %13 : vector<32x256xf32>
    %c0_10 = arith.constant 0 : index
    %c0_11 = arith.constant 0 : index
    %15 = vector.load %arg6[%c0_10, %c0_11] : memref<32x32xbf16, #tpu.memory_space<vmem>>, vector<32x32xbf16>
    %16 = arith.truncf %14 : vector<32x256xf32> to vector<32x256xbf16>
    %cst_12 = arith.constant dense<0.000000e+00> : vector<32x256xf32>
    %17 = tpu.matmul %15, %16, %cst_12 {dimension_numbers = #tpu.dot_dimension_numbers<[1], [0], [0], [1], [0, 0, 1, 1], [], []>} : vector<32x32xbf16>, vector<32x256xbf16>, vector<32x256xf32> -> vector<32x256xf32>
    %c0_13 = arith.constant 0 : index
    %c0_14 = arith.constant 0 : index
    %18 = vector.load %arg7[%c0_13, %c0_14] : memref<32x1xf32, #tpu.memory_space<vmem>>, vector<32x1xf32>
    %19 = vector.broadcast %18 : vector<32x1xf32> to vector<32x256xf32>
    %20 = arith.addf %17, %19 : vector<32x256xf32>
    %21 = math.tanh %20 : vector<32x256xf32>
    %c0_15 = arith.constant 0 : index
    %c0_16 = arith.constant 0 : index
    %22 = vector.load %arg8[%c0_15, %c0_16] : memref<16x32xbf16, #tpu.memory_space<vmem>>, vector<16x32xbf16>
    %23 = arith.truncf %21 : vector<32x256xf32> to vector<32x256xbf16>
    %cst_17 = arith.constant dense<0.000000e+00> : vector<16x256xf32>
    %24 = tpu.matmul %22, %23, %cst_17 {dimension_numbers = #tpu.dot_dimension_numbers<[1], [0], [0], [1], [0, 0, 1, 1], [], []>} : vector<16x32xbf16>, vector<32x256xbf16>, vector<16x256xf32> -> vector<16x256xf32>
    %c0_18 = arith.constant 0 : index
    %c0_19 = arith.constant 0 : index
    %25 = vector.load %arg9[%c0_18, %c0_19] : memref<16x1xf32, #tpu.memory_space<vmem>>, vector<16x1xf32>
    %26 = vector.broadcast %25 : vector<16x1xf32> to vector<16x256xf32>
    %27 = arith.addf %24, %26 : vector<16x256xf32>
    %28 = math.tanh %27 : vector<16x256xf32>
    %c0_20 = arith.constant 0 : index
    %c0_21 = arith.constant 0 : index
    %29 = vector.load %arg10[%c0_20, %c0_21] : memref<16x1xf32, #tpu.memory_space<vmem>>, vector<16x1xf32>
    %30 = vector.broadcast %29 : vector<16x1xf32> to vector<16x256xf32>
    %31 = arith.mulf %30, %28 : vector<16x256xf32>
    %cst_22 = arith.constant dense<0.000000e+00> : vector<256xf32>
    %32 = vector.multi_reduction <add>, %31, %cst_22 [0] : vector<16x256xf32> to vector<256xf32>
    %33 = vector.shape_cast %32 : vector<256xf32> to vector<1x256xf32>
    %c0_23 = arith.constant 0 : index
    %c0_24 = arith.constant 0 : index
    %34 = vector.load %arg11[%c0_23, %c0_24] : memref<1x1xf32, #tpu.memory_space<vmem>>, vector<1x1xf32>
    %35 = vector.broadcast %34 : vector<1x1xf32> to vector<1x256xf32>
    %36 = arith.addf %33, %35 : vector<1x256xf32>
    %cst_25 = arith.constant 5.000000e-01 : f32
    %37 = vector.broadcast %cst_25 : f32 to vector<1x256xf32>
    %38 = arith.mulf %37, %36 : vector<1x256xf32>
    %39 = math.tanh %38 : vector<1x256xf32>
    %cst_26 = arith.constant 1.000000e+00 : f32
    %40 = vector.broadcast %cst_26 : f32 to vector<1x256xf32>
    %41 = arith.addf %39, %40 : vector<1x256xf32>
    %cst_27 = arith.constant 5.000000e-01 : f32
    %42 = vector.broadcast %cst_27 : f32 to vector<1x256xf32>
    %43 = arith.mulf %42, %41 : vector<1x256xf32>
    %c0_28 = arith.constant 0 : index
    %c0_29 = arith.constant 0 : index
    %44 = vector.load %arg12[%c0_28, %c0_29] : memref<1x256xf32, #tpu.memory_space<vmem>>, vector<1x256xf32>
    tpu.vector_store %arg12[%c0_28, %c0_29], %43 {strides = array<i32>} : memref<1x256xf32, #tpu.memory_space<vmem>>, vector<1x256xf32>,
    return
  }
  func.func @transform_0(%arg0: i32) -> (i32, i32) {
    %c0_i32 = arith.constant 0 : i32
    %c0_i32_0 = arith.constant 0 : i32
    return %arg0, %c0_i32 : i32, i32
  }
  func.func @transform_1(%arg0: i32) -> (i32, i32) {
    %c0_i32 = arith.constant 0 : i32
    %c0_i32_0 = arith.constant 0 : i32
    %c0_i32_1 = arith.constant 0 : i32
    return %c0_i32, %c0_i32_0 : i32, i32
  }
  func.func @transform_2(%arg0: i32) -> (i32, i32) {
    %c0_i32 = arith.constant 0 : i32
    %c0_i32_0 = arith.constant 0 : i32
    %c0_i32_1 = arith.constant 0 : i32
    return %c0_i32, %c0_i32_0 : i32, i32
  }
  func.func @transform_3(%arg0: i32) -> (i32, i32) {
    %c0_i32 = arith.constant 0 : i32
    %c0_i32_0 = arith.constant 0 : i32
    %c0_i32_1 = arith.constant 0 : i32
    return %c0_i32, %c0_i32_0 : i32, i32
  }
  func.func @transform_4(%arg0: i32) -> (i32, i32) {
    %c0_i32 = arith.constant 0 : i32
    %c0_i32_0 = arith.constant 0 : i32
    %c0_i32_1 = arith.constant 0 : i32
    return %c0_i32, %c0_i32_0 : i32, i32
  }
  func.func @transform_5(%arg0: i32) -> (i32, i32) {
    %c0_i32 = arith.constant 0 : i32
    %c0_i32_0 = arith.constant 0 : i32
    %c0_i32_1 = arith.constant 0 : i32
    return %c0_i32, %c0_i32_0 : i32, i32
  }
  func.func @transform_6(%arg0: i32) -> (i32, i32) {
    %c0_i32 = arith.constant 0 : i32
    %c0_i32_0 = arith.constant 0 : i32
    %c0_i32_1 = arith.constant 0 : i32
    return %c0_i32, %c0_i32_0 : i32, i32
  }
  func.func @transform_7(%arg0: i32) -> (i32, i32) {
    %c0_i32 = arith.constant 0 : i32
    %c0_i32_0 = arith.constant 0 : i32
    %c0_i32_1 = arith.constant 0 : i32
    return %c0_i32, %c0_i32_0 : i32, i32
  }
  func.func @transform_8(%arg0: i32) -> (i32, i32) {
    %c0_i32 = arith.constant 0 : i32
    %c0_i32_0 = arith.constant 0 : i32
    %c0_i32_1 = arith.constant 0 : i32
    return %c0_i32, %c0_i32_0 : i32, i32
  }
  func.func @transform_9(%arg0: i32) -> (i32, i32) {
    %c0_i32 = arith.constant 0 : i32
    %c0_i32_0 = arith.constant 0 : i32
    %c0_i32_1 = arith.constant 0 : i32
    return %c0_i32, %c0_i32_0 : i32, i32
  }
  func.func @transform_10(%arg0: i32) -> (i32, i32) {
    %c0_i32 = arith.constant 0 : i32
    %c0_i32_0 = arith.constant 0 : i32
    %c0_i32_1 = arith.constant 0 : i32
    return %c0_i32, %c0_i32_0 : i32, i32
  }
  func.func @transform_11(%arg0: i32) -> (i32, i32) {
    %c0_i32 = arith.constant 0 : i32
    %c0_i32_0 = arith.constant 0 : i32
    return %c0_i32, %arg0 : i32, i32
  }
}

</mosaic_0001>

<llo_original>
// kernel: tpu_custom_call.1
$region0: #{tpu_custom_call.1}
  #allocation0 [shape = 'u32[]', space=smem, size = 0x4, offset = 0x4, fixed_abs, tag = 'smem constant byte address 0x4 - core index']
  #allocation1 [shape = 'u32[72,128]{1,0:T(1,128)}', space=vmem, size = 0x9000, scoped, tag = 'internal scratch']
  #allocation2 [shape = 'f32[1,1]{1,0:T(1,128)S(1)}', space=vmem, size = 0x200, scoped, tag = 'scoped memory for tpu_custom_call.1']
  %s0 = inlined_call_operand.vmem [shape: f32[256,28], index: 0, kind: input, shape index: {}]
  %s1 = inlined_call_operand.vmem [shape: bf16[64,28], index: 1, kind: input, shape index: {}]
  %s2 = inlined_call_operand.vmem [shape: f32[64,1], index: 2, kind: input, shape index: {}]
  %s3 = inlined_call_operand.vmem [shape: bf16[32,64], index: 3, kind: input, shape index: {}]
  %s4 = inlined_call_operand.vmem [shape: f32[32,1], index: 4, kind: input, shape index: {}]
  %s5 = inlined_call_operand.vmem [shape: bf16[32,32], index: 5, kind: input, shape index: {}]
  %s6 = inlined_call_operand.vmem [shape: f32[32,1], index: 6, kind: input, shape index: {}]
  %s7 = inlined_call_operand.vmem [shape: bf16[16,32], index: 7, kind: input, shape index: {}]
  %s8 = inlined_call_operand.vmem [shape: f32[16,1], index: 8, kind: input, shape index: {}]
  %s9 = inlined_call_operand.vmem [shape: f32[16,1], index: 9, kind: input, shape index: {}]
  %s10 = inlined_call_operand.<no memory space> [shape: f32[1,1], index: 10, kind: input, shape index: {}]
  %s11 = inlined_call_operand.hbm [shape: f32[1,256], index: 11, kind: output, shape index: {}]
  %s12 = sld [smem:[#allocation0]]
  $region54: #{tpu_custom_call.1} parent=0
    _
  %s14 = ssub.s32 1, %s12
  %s15 = scalar_select 0, %s14, %s12
  %v16 = vstv %s10
  %17 = vst [vmem:[#allocation2] sm:$0x1] %v16
  $region1: #{tpu_custom_call.1} parent=0
    #allocation3 [shape = 'u8[1024]{0}', space=vmem, size = 0x400, scoped, tag = 'output window, operand 0, single buffered']
    #allocation4 [shape = 's32[1]{0}', space=sflag, size = 0x4, scoped, tag = 'scoped memory for tpu_custom_call.1']
    %18 = vsyncpa [#allocation4], 0
    // Predicated region
    $region2: #{tpu_custom_call.1} parent=1 // pred_check
      _
    $region3: #{tpu_custom_call.1} parent=1 // pred_check_branch
      %20 = sbr.rel (0) target = $region5
    $region4: #{tpu_custom_call.1} parent=1 // pred_region
      _
    $region5: #{tpu_custom_call.1} parent=1 // pred_fallthru
      _
    // Predicated region
    $region6: #{tpu_custom_call.1} parent=1 // pred_check
      _
    $region7: #{tpu_custom_call.1} parent=1 // pred_check_branch
      %22 = sbr.rel (0) target = $region9
    $region8: #{tpu_custom_call.1} parent=1 // pred_region
      _
    $region9: #{tpu_custom_call.1} parent=1 // pred_fallthru
      _
    // Predicated region
    $region10: #{tpu_custom_call.1} parent=1 // pred_check
      _
    $region11: #{tpu_custom_call.1} parent=1 // pred_check_branch
      %24 = sbr.rel (0) target = $region13
    $region12: #{tpu_custom_call.1} parent=1 // pred_region
      _
    $region13: #{tpu_custom_call.1} parent=1 // pred_fallthru
      _
    // Predicated region
    $region14: #{tpu_custom_call.1} parent=1 // pred_check
      _
    $region15: #{tpu_custom_call.1} parent=1 // pred_check_branch
      %26 = sbr.rel (0) target = $region17
    $region16: #{tpu_custom_call.1} parent=1 // pred_region
      _
    $region17: #{tpu_custom_call.1} parent=1 // pred_fallthru
      _
    // Predicated region
    $region18: #{tpu_custom_call.1} parent=1 // pred_check
      _
    $region19: #{tpu_custom_call.1} parent=1 // pred_check_branch
      %28 = sbr.rel (0) target = $region21
    $region20: #{tpu_custom_call.1} parent=1 // pred_region
      _
    $region21: #{tpu_custom_call.1} parent=1 // pred_fallthru
      _
    // Predicated region
    $region22: #{tpu_custom_call.1} parent=1 // pred_check
      _
    $region23: #{tpu_custom_call.1} parent=1 // pred_check_branch
      %30 = sbr.rel (0) target = $region25
    $region24: #{tpu_custom_call.1} parent=1 // pred_region
      _
    $region25: #{tpu_custom_call.1} parent=1 // pred_fallthru
      _
    // Predicated region
    $region26: #{tpu_custom_call.1} parent=1 // pred_check
      _
    $region27: #{tpu_custom_call.1} parent=1 // pred_check_branch
      %32 = sbr.rel (0) target = $region29
    $region28: #{tpu_custom_call.1} parent=1 // pred_region
      _
    $region29: #{tpu_custom_call.1} parent=1 // pred_fallthru
      _
    // Predicated region
    $region30: #{tpu_custom_call.1} parent=1 // pred_check
      _
    $region31: #{tpu_custom_call.1} parent=1 // pred_check_branch
      %34 = sbr.rel (0) target = $region33
    $region32: #{tpu_custom_call.1} parent=1 // pred_region
      _
    $region33: #{tpu_custom_call.1} parent=1 // pred_fallthru
      _
    // Predicated region
    $region34: #{tpu_custom_call.1} parent=1 // pred_check
      _
    $region35: #{tpu_custom_call.1} parent=1 // pred_check_branch
      %36 = sbr.rel (0) target = $region37
    $region36: #{tpu_custom_call.1} parent=1 // pred_region
      _
    $region37: #{tpu_custom_call.1} parent=1 // pred_fallthru
      _
    // Predicated region
    $region38: #{tpu_custom_call.1} parent=1 // pred_check
      _
    $region39: #{tpu_custom_call.1} parent=1 // pred_check_branch
      %38 = sbr.rel (0) target = $region41
    $region40: #{tpu_custom_call.1} parent=1 // pred_region
      _
    $region41: #{tpu_custom_call.1} parent=1 // pred_fallthru
      _
    // Predicated region
    $region42: #{tpu_custom_call.1} parent=1 // pred_check
      _
    $region43: #{tpu_custom_call.1} parent=1 // pred_check_branch
      %40 = sbr.rel (0) target = $region45
    $region44: #{tpu_custom_call.1} parent=1 // pred_region
      _
    $region45: #{tpu_custom_call.1} parent=1 // pred_fallthru
      _
    %v42 = vld [vmem:[%s0] sm:$0xff]
    %v43 = vld [vmem:[%s0 + $0x8] sm:$0xff]
    %v44 = vld [vmem:[%s0 + $0x10] sm:$0xff]
    %v45 = vld [vmem:[%s0 + $0x18] sm:$0xff]
    %v46 = vld [vmem:[%s0 + $0x20] sm:$0xff]
    %v47 = vld [vmem:[%s0 + $0x28] sm:$0xff]
    %v48 = vld [vmem:[%s0 + $0x30] sm:$0xff]
    %v49 = vld [vmem:[%s0 + $0x38] sm:$0xff]
    %v50 = vld [vmem:[%s0 + $0x40] sm:$0xff]
    %v51 = vld [vmem:[%s0 + $0x48] sm:$0xff]
    %v52 = vld [vmem:[%s0 + $0x50] sm:$0xff]
    %v53 = vld [vmem:[%s0 + $0x58] sm:$0xff]
    %v54 = vld [vmem:[%s0 + $0x60] sm:$0xff]
    %v55 = vld [vmem:[%s0 + $0x68] sm:$0xff]
    %v56 = vld [vmem:[%s0 + $0x70] sm:$0xff]
    %v57 = vld [vmem:[%s0 + $0x78] sm:$0xff]
    %v58 = vld [vmem:[%s0 + $0x80] sm:$0xff]
    %v59 = vld [vmem:[%s0 + $0x88] sm:$0xff]
    %v60 = vld [vmem:[%s0 + $0x90] sm:$0xff]
    %v61 = vld [vmem:[%s0 + $0x98] sm:$0xff]
    %v62 = vld [vmem:[%s0 + $0xa0] sm:$0xff]
    %v63 = vld [vmem:[%s0 + $0xa8] sm:$0xff]
    %v64 = vld [vmem:[%s0 + $0xb0] sm:$0xff]
    %v65 = vld [vmem:[%s0 + $0xb8] sm:$0xff]
    %v66 = vld [vmem:[%s0 + $0xc0] sm:$0xff]
    %v67 = vld [vmem:[%s0 + $0xc8] sm:$0xff]
    %v68 = vld [vmem:[%s0 + $0xd0] sm:$0xff]
    %v69 = vld [vmem:[%s0 + $0xd8] sm:$0xff]
    %v70 = vld [vmem:[%s0 + $0xe0] sm:$0xff]
    %v71 = vld [vmem:[%s0 + $0xe8] sm:$0xff]
    %v72 = vld [vmem:[%s0 + $0xf0] sm:$0xff]
    %v73 = vld [vmem:[%s0 + $0xf8] sm:$0xff]
    %v74 = vpack.c.bf16 %v43, %v42
    %v75 = vpack.c.bf16 %v45, %v44
    %v76 = vpack.c.bf16 %v47, %v46
    %v77 = vpack.c.bf16 %v49, %v48
    %v78 = vpack.c.bf16 %v51, %v50
    %v79 = vpack.c.bf16 %v53, %v52
    %v80 = vpack.c.bf16 %v55, %v54
    %v81 = vpack.c.bf16 %v57, %v56
    %v82 = vpack.c.bf16 %v59, %v58
    %v83 = vpack.c.bf16 %v61, %v60
    %v84 = vpack.c.bf16 %v63, %v62
    %v85 = vpack.c.bf16 %v65, %v64
    %v86 = vpack.c.bf16 %v67, %v66
    %v87 = vpack.c.bf16 %v69, %v68
    %v88 = vpack.c.bf16 %v71, %v70
    %v89 = vpack.c.bf16 %v73, %v72
    %v90 = vld [vmem:[%s1] sm:$0xf]
    %v91 = vld [vmem:[%s1 + $0x4] sm:$0xf]
    %v92 = vld [vmem:[%s1 + $0x8] sm:$0xf]
    %v93 = vld [vmem:[%s1 + $0xc] sm:$0xf]
    %v94 = vld [vmem:[%s1 + $0x10] sm:$0xf]
    %v95 = vld [vmem:[%s1 + $0x14] sm:$0xf]
    %v96 = vld [vmem:[%s1 + $0x18] sm:$0xf]
    %v97 = vld [vmem:[%s1 + $0x1c] sm:$0xf]
    %v98 = vld [vmem:[%s2] sm:$0xff]
    %v99 = vld [vmem:[%s2 + $0x8] sm:$0xff]
    %v100 = vld [vmem:[%s2 + $0x10] sm:$0xff]
    %v101 = vld [vmem:[%s2 + $0x18] sm:$0xff]
    %v102 = vld [vmem:[%s2 + $0x20] sm:$0xff]
    %v103 = vld [vmem:[%s2 + $0x28] sm:$0xff]
    %v104 = vld [vmem:[%s2 + $0x30] sm:$0xff]
    %v105 = vld [vmem:[%s2 + $0x38] sm:$0xff]
    %107 = vset.pattern.permute.xlu0 0
    %108 = vperm.xlu0 %107, %v98
    %v109 = vpop.permute.xlu0 %108
    %112 = vset.pattern.permute.xlu0 0
    %113 = vperm.xlu0 %112, %v99
    %v114 = vpop.permute.xlu0 %113
    %117 = vset.pattern.permute.xlu0 0
    %118 = vperm.xlu0 %117, %v100
    %v119 = vpop.permute.xlu0 %118
    %122 = vset.pattern.permute.xlu0 0
    %123 = vperm.xlu0 %122, %v101
    %v124 = vpop.permute.xlu0 %123
    %127 = vset.pattern.permute.xlu0 0
    %128 = vperm.xlu0 %127, %v102
    %v129 = vpop.permute.xlu0 %128
    %132 = vset.pattern.permute.xlu0 0
    %133 = vperm.xlu0 %132, %v103
    %v134 = vpop.permute.xlu0 %133
    %137 = vset.pattern.permute.xlu0 0
    %138 = vperm.xlu0 %137, %v104
    %v139 = vpop.permute.xlu0 %138
    %142 = vset.pattern.permute.xlu0 0
    %143 = vperm.xlu0 %142, %v105
    %v144 = vpop.permute.xlu0 %143
    %v154 = vunpack.c.l.b16 %v90
    %v155 = vunpack.c.l.b16 %v91
    %v156 = vunpack.c.l.b16 %v92
    %v157 = vunpack.c.l.b16 %v93
    %v158 = vunpack.c.l.b16 %v94
    %v159 = vunpack.c.l.b16 %v95
    %v160 = vunpack.c.l.b16 %v96
    %v161 = vunpack.c.l.b16 %v97
    %v162 = vpack.c.b16 %v155, %v154
    %v163 = vpack.c.b16 %v157, %v156
    %v164 = vpack.c.b16 %v159, %v158
    %v165 = vpack.c.b16 %v161, %v160
    %vm166 = vcmask 228352
    %v168 = vsel %vm166, %v162, 0
    %v171 = vsel %vm166, %v163, 0
    %v174 = vsel %vm166, %v164, 0
    %v177 = vsel %vm166, %v165, 0
    %v180 = vsel %vm166, %v74, 0
    %v183 = vsel %vm166, %v75, 0
    %v186 = vsel %vm166, %v76, 0
    %v189 = vsel %vm166, %v77, 0
    %v192 = vsel %vm166, %v78, 0
    %v195 = vsel %vm166, %v79, 0
    %v198 = vsel %vm166, %v80, 0
    %v201 = vsel %vm166, %v81, 0
    %v204 = vsel %vm166, %v82, 0
    %v207 = vsel %vm166, %v83, 0
    %v210 = vsel %vm166, %v84, 0
    %v213 = vsel %vm166, %v85, 0
    %v216 = vsel %vm166, %v86, 0
    %v219 = vsel %vm166, %v87, 0
    %v222 = vsel %vm166, %v88, 0
    %v225 = vsel %vm166, %v89, 0
    %227 = vmatpush.bf16.xpose.msra.mxu0 %v201
    %228 = vmatpush.bf16.xpose.msra.mxu0 %v198
    %229 = vmatpush.bf16.xpose.msra.mxu0 %v195
    %230 = vmatpush.bf16.xpose.msra.mxu0 %v192
    %231 = vmatpush.bf16.xpose.msra.mxu0 %v189
    %232 = vmatpush.bf16.xpose.msra.mxu0 %v186
    %233 = vmatpush.bf16.xpose.msra.mxu0 %v183
    %234 = vmatpush.bf16.xpose.msra.mxu0 %v180
    %235 = vmatmul.bf16.gmra.mxu0 %v168
    %v236 = vpop.f32.mrf.mxu0
    %v237 = vadd.f32 %v109, %v236
    %v238 = vpop.f32.mrf.mxu0
    %v239 = vadd.f32 %v114, %v238
    %240 = vmatmul.bf16.gmra.mxu0 %v171
    %v241 = vpop.f32.mrf.mxu0
    %v242 = vadd.f32 %v119, %v241
    %v243 = vpop.f32.mrf.mxu0
    %v244 = vadd.f32 %v124, %v243
    %245 = vmatmul.bf16.gmra.mxu0 %v174
    %v246 = vpop.f32.mrf.mxu0
    %v247 = vadd.f32 %v129, %v246
    %v248 = vpop.f32.mrf.mxu0
    %v249 = vadd.f32 %v134, %v248
    %250 = vmatmul.bf16.gmra.mxu0 %v177
    %v251 = vpop.f32.mrf.mxu0
    %v252 = vadd.f32 %v139, %v251
    %v253 = vpop.f32.mrf.mxu0
    %v254 = vadd.f32 %v144, %v253
    %255 = vdwg.mxu0
    %256 = vmatpush.bf16.xpose.msra.mxu0 %v225
    %257 = vmatpush.bf16.xpose.msra.mxu0 %v222
    %258 = vmatpush.bf16.xpose.msra.mxu0 %v219
    %259 = vmatpush.bf16.xpose.msra.mxu0 %v216
    %260 = vmatpush.bf16.xpose.msra.mxu0 %v213
    %261 = vmatpush.bf16.xpose.msra.mxu0 %v210
    %262 = vmatpush.bf16.xpose.msra.mxu0 %v207
    %263 = vmatpush.bf16.xpose.msra.mxu0 %v204
    %264 = vmatmul.bf16.gmra.mxu0 %v168
    %v265 = vpop.f32.mrf.mxu0
    %v266 = vadd.f32 %v109, %v265
    %v267 = vpop.f32.mrf.mxu0
    %v268 = vadd.f32 %v114, %v267
    %269 = vmatmul.bf16.gmra.mxu0 %v171
    %v270 = vpop.f32.mrf.mxu0
    %v271 = vadd.f32 %v119, %v270
    %v272 = vpop.f32.mrf.mxu0
    %v273 = vadd.f32 %v124, %v272
    %274 = vmatmul.bf16.gmra.mxu0 %v174
    %v275 = vpop.f32.mrf.mxu0
    %v276 = vadd.f32 %v129, %v275
    %v277 = vpop.f32.mrf.mxu0
    %v278 = vadd.f32 %v134, %v277
    %279 = vmatmul.bf16.gmra.mxu0 %v177
    %v280 = vpop.f32.mrf.mxu0
    %v281 = vadd.f32 %v139, %v280
    %v282 = vpop.f32.mrf.mxu0
    %v283 = vadd.f32 %v144, %v282
    %284 = vdwg.mxu0
    %v285 = vtanh.pop %v237
    %v286 = vtanh.pop %v266
    %v287 = vtanh.pop %v239
    %v288 = vtanh.pop %v268
    %v289 = vtanh.pop %v242
    %v290 = vtanh.pop %v271
    %v291 = vtanh.pop %v244
    %v292 = vtanh.pop %v273
    %v293 = vtanh.pop %v247
    %v294 = vtanh.pop %v276
    %v295 = vtanh.pop %v249
    %v296 = vtanh.pop %v278
    %v297 = vtanh.pop %v252
    %v298 = vtanh.pop %v281
    %v299 = vtanh.pop %v254
    %v300 = vtanh.pop %v283
    %v301 = vld [vmem:[%s3] sm:$0xf]
    %v302 = vld [vmem:[%s3 + $0x4] sm:$0xf]
    %v303 = vld [vmem:[%s3 + $0x8] sm:$0xf]
    %v304 = vld [vmem:[%s3 + $0xc] sm:$0xf]
    %v305 = vpack.c.bf16 %v287, %v285
    %v306 = vpack.c.bf16 %v288, %v286
    %v307 = vpack.c.bf16 %v291, %v289
    %v308 = vpack.c.bf16 %v292, %v290
    %v309 = vpack.c.bf16 %v295, %v293
    %v310 = vpack.c.bf16 %v296, %v294
    %v311 = vpack.c.bf16 %v299, %v297
    %v312 = vpack.c.bf16 %v300, %v298
    %v313 = vld [vmem:[%s4] sm:$0xff]
    %v314 = vld [vmem:[%s4 + $0x8] sm:$0xff]
    %v315 = vld [vmem:[%s4 + $0x10] sm:$0xff]
    %v316 = vld [vmem:[%s4 + $0x18] sm:$0xff]
    %318 = vset.pattern.permute.xlu0 0
    %319 = vperm.xlu0 %318, %v313
    %v320 = vpop.permute.xlu0 %319
    %323 = vset.pattern.permute.xlu0 0
    %324 = vperm.xlu0 %323, %v314
    %v325 = vpop.permute.xlu0 %324
    %328 = vset.pattern.permute.xlu0 0
    %329 = vperm.xlu0 %328, %v315
    %v330 = vpop.permute.xlu0 %329
    %333 = vset.pattern.permute.xlu0 0
    %334 = vperm.xlu0 %333, %v316
    %v335 = vpop.permute.xlu0 %334
    %v341 = vunpack.c.l.b16 %v301
    %v342 = vunpack.c.l.b16 %v302
    %v343 = vunpack.c.l.b16 %v303
    %v344 = vunpack.c.l.b16 %v304
    %v345 = vpack.c.b16 %v342, %v341
    %v346 = vpack.c.b16 %v344, %v343
    %vm347 = vcmask 523264
    %v349 = vsel %vm347, %v345, 0
    %v352 = vsel %vm347, %v346, 0
    %354 = vmatpush.bf16.msra.mxu0 0
    %355 = vmatpush.bf16.msra.mxu0 0
    %356 = vmatpush.bf16.msra.mxu0 0
    %357 = vmatpush.bf16.msra.mxu0 0
    %358 = vmatpush.bf16.msra.mxu0 %v311
    %359 = vmatpush.bf16.msra.mxu0 %v309
    %360 = vmatpush.bf16.msra.mxu0 %v307
    %361 = vmatpush.bf16.msra.mxu0 %v305
    %362 = vmatmul.bf16.gmra.mxu0 %v349
    %v363 = vpop.f32.mrf.mxu0
    %v364 = vadd.f32 %v320, %v363
    %v365 = vpop.f32.mrf.mxu0
    %v366 = vadd.f32 %v325, %v365
    %367 = vmatmul.bf16.gmra.mxu0 %v352
    %v368 = vpop.f32.mrf.mxu0
    %v369 = vadd.f32 %v330, %v368
    %v370 = vpop.f32.mrf.mxu0
    %v371 = vadd.f32 %v335, %v370
    %372 = vdwg.mxu0
    %373 = vmatpush.bf16.msra.mxu0 0
    %374 = vmatpush.bf16.msra.mxu0 0
    %375 = vmatpush.bf16.msra.mxu0 0
    %376 = vmatpush.bf16.msra.mxu0 0
    %377 = vmatpush.bf16.msra.mxu0 %v312
    %378 = vmatpush.bf16.msra.mxu0 %v310
    %379 = vmatpush.bf16.msra.mxu0 %v308
    %380 = vmatpush.bf16.msra.mxu0 %v306
    %381 = vmatmul.bf16.gmra.mxu0 %v349
    %v382 = vpop.f32.mrf.mxu0
    %v383 = vadd.f32 %v320, %v382
    %v384 = vpop.f32.mrf.mxu0
    %v385 = vadd.f32 %v325, %v384
    %386 = vmatmul.bf16.gmra.mxu0 %v352
    %v387 = vpop.f32.mrf.mxu0
    %v388 = vadd.f32 %v330, %v387
    %v389 = vpop.f32.mrf.mxu0
    %v390 = vadd.f32 %v335, %v389
    %391 = vdwg.mxu0
    %v392 = vtanh.pop %v364
    %v393 = vtanh.pop %v383
    %v394 = vtanh.pop %v366
    %v395 = vtanh.pop %v385
    %v396 = vtanh.pop %v369
    %v397 = vtanh.pop %v388
    %v398 = vtanh.pop %v371
    %v399 = vtanh.pop %v390
    %v400 = vld [vmem:[%s5] sm:$0xf]
    %v401 = vld [vmem:[%s5 + $0x4] sm:$0xf]
    %v402 = vld [vmem:[%s5 + $0x8] sm:$0xf]
    %v403 = vld [vmem:[%s5 + $0xc] sm:$0xf]
    %v404 = vpack.c.bf16 %v394, %v392
    %v405 = vpack.c.bf16 %v395, %v393
    %v406 = vpack.c.bf16 %v398, %v396
    %v407 = vpack.c.bf16 %v399, %v397
    %v408 = vld [vmem:[%s6] sm:$0xff]
    %v409 = vld [vmem:[%s6 + $0x8] sm:$0xff]
    %v410 = vld [vmem:[%s6 + $0x10] sm:$0xff]
    %v411 = vld [vmem:[%s6 + $0x18] sm:$0xff]
    %413 = vset.pattern.permute.xlu0 0
    %414 = vperm.xlu0 %413, %v408
    %v415 = vpop.permute.xlu0 %414
    %418 = vset.pattern.permute.xlu0 0
    %419 = vperm.xlu0 %418, %v409
    %v420 = vpop.permute.xlu0 %419
    %423 = vset.pattern.permute.xlu0 0
    %424 = vperm.xlu0 %423, %v410
    %v425 = vpop.permute.xlu0 %424
    %428 = vset.pattern.permute.xlu0 0
    %429 = vperm.xlu0 %428, %v411
    %v430 = vpop.permute.xlu0 %429
    %v436 = vunpack.c.l.b16 %v400
    %v437 = vunpack.c.l.b16 %v401
    %v438 = vunpack.c.l.b16 %v402
    %v439 = vunpack.c.l.b16 %v403
    %v440 = vpack.c.b16 %v437, %v436
    %v441 = vpack.c.b16 %v439, %v438
    %vm442 = vcmask 261120
    %v444 = vsel %vm442, %v440, 0
    %v447 = vsel %vm442, %v441, 0
    %449 = vmatpush.bf16.msra.mxu0 0
    %450 = vmatpush.bf16.msra.mxu0 0
    %451 = vmatpush.bf16.msra.mxu0 0
    %452 = vmatpush.bf16.msra.mxu0 0
    %453 = vmatpush.bf16.msra.mxu0 0
    %454 = vmatpush.bf16.msra.mxu0 0
    %455 = vmatpush.bf16.msra.mxu0 %v406
    %456 = vmatpush.bf16.msra.mxu0 %v404
    %457 = vmatmul.bf16.gmra.mxu0 %v444
    %v458 = vpop.f32.mrf.mxu0
    %v459 = vadd.f32 %v415, %v458
    %v460 = vpop.f32.mrf.mxu0
    %v461 = vadd.f32 %v420, %v460
    %462 = vmatmul.bf16.gmra.mxu0 %v447
    %v463 = vpop.f32.mrf.mxu0
    %v464 = vadd.f32 %v425, %v463
    %v465 = vpop.f32.mrf.mxu0
    %v466 = vadd.f32 %v430, %v465
    %467 = vdwg.mxu0
    %468 = vmatpush.bf16.msra.mxu0 0
    %469 = vmatpush.bf16.msra.mxu0 0
    %470 = vmatpush.bf16.msra.mxu0 0
    %471 = vmatpush.bf16.msra.mxu0 0
    %472 = vmatpush.bf16.msra.mxu0 0
    %473 = vmatpush.bf16.msra.mxu0 0
    %474 = vmatpush.bf16.msra.mxu0 %v407
    %475 = vmatpush.bf16.msra.mxu0 %v405
    %476 = vmatmul.bf16.gmra.mxu0 %v444
    %v477 = vpop.f32.mrf.mxu0
    %v478 = vadd.f32 %v415, %v477
    %v479 = vpop.f32.mrf.mxu0
    %v480 = vadd.f32 %v420, %v479
    %481 = vmatmul.bf16.gmra.mxu0 %v447
    %v482 = vpop.f32.mrf.mxu0
    %v483 = vadd.f32 %v425, %v482
    %v484 = vpop.f32.mrf.mxu0
    %v485 = vadd.f32 %v430, %v484
    %486 = vdwg.mxu0
    %v487 = vtanh.pop %v459
    %v488 = vtanh.pop %v478
    %v489 = vtanh.pop %v461
    %v490 = vtanh.pop %v480
    %v491 = vtanh.pop %v464
    %v492 = vtanh.pop %v483
    %v493 = vtanh.pop %v466
    %v494 = vtanh.pop %v485
    %v495 = vld [vmem:[%s7] sm:$0xf]
    %v496 = vld [vmem:[%s7 + $0x4] sm:$0xf]
    %v497 = vpack.c.bf16 %v489, %v487
    %v498 = vpack.c.bf16 %v490, %v488
    %v499 = vpack.c.bf16 %v493, %v491
    %v500 = vpack.c.bf16 %v494, %v492
    %v501 = vld [vmem:[%s8] sm:$0xff]
    %v502 = vld [vmem:[%s8 + $0x8] sm:$0xff]
    %504 = vset.pattern.permute.xlu0 0
    %505 = vperm.xlu0 %504, %v501
    %v506 = vpop.permute.xlu0 %505
    %509 = vset.pattern.permute.xlu0 0
    %510 = vperm.xlu0 %509, %v502
    %v511 = vpop.permute.xlu0 %510
    %v515 = vunpack.c.l.b16 %v495
    %v516 = vunpack.c.l.b16 %v496
    %v517 = vpack.c.b16 %v516, %v515
    %v519 = vsel %vm442, %v517, 0
    %521 = vmatpush.bf16.msra.mxu0 0
    %522 = vmatpush.bf16.msra.mxu0 0
    %523 = vmatpush.bf16.msra.mxu0 0
    %524 = vmatpush.bf16.msra.mxu0 0
    %525 = vmatpush.bf16.msra.mxu0 0
    %526 = vmatpush.bf16.msra.mxu0 0
    %527 = vmatpush.bf16.msra.mxu0 %v499
    %528 = vmatpush.bf16.msra.mxu0 %v497
    %529 = vmatmul.bf16.gmra.mxu0 %v519
    %v530 = vpop.f32.mrf.mxu0
    %v531 = vadd.f32 %v506, %v530
    %v532 = vpop.f32.mrf.mxu0
    %v533 = vadd.f32 %v511, %v532
    %534 = vdwg.mxu0
    %535 = vmatpush.bf16.msra.mxu0 0
    %536 = vmatpush.bf16.msra.mxu0 0
    %537 = vmatpush.bf16.msra.mxu0 0
    %538 = vmatpush.bf16.msra.mxu0 0
    %539 = vmatpush.bf16.msra.mxu0 0
    %540 = vmatpush.bf16.msra.mxu0 0
    %541 = vmatpush.bf16.msra.mxu0 %v500
    %542 = vmatpush.bf16.msra.mxu0 %v498
    %543 = vmatmul.bf16.gmra.mxu0 %v519
    %v544 = vpop.f32.mrf.mxu0
    %v545 = vadd.f32 %v506, %v544
    %v546 = vpop.f32.mrf.mxu0
    %v547 = vadd.f32 %v511, %v546
    %548 = vdwg.mxu0
    %v549 = vtanh.pop %v531
    %v550 = vtanh.pop %v545
    %v551 = vtanh.pop %v533
    %v552 = vtanh.pop %v547
    %v553 = vld [vmem:[%s9] sm:$0xff]
    %v554 = vld [vmem:[%s9 + $0x8] sm:$0xff]
    %556 = vset.pattern.permute.xlu0 0
    %557 = vperm.xlu0 %556, %v553
    %v558 = vpop.permute.xlu0 %557
    %561 = vset.pattern.permute.xlu0 0
    %562 = vperm.xlu0 %561, %v554
    %v563 = vpop.permute.xlu0 %562
    %v565 = vmul.f32 %v558, %v549
    %v566 = vmul.f32 %v558, %v550
    %v567 = vmul.f32 %v563, %v551
    %v568 = vmul.f32 %v563, %v552
    %v569 = vadd.f32 %v565, %v567
    %v570 = vrot.slane %v569, 4
    %v571 = vadd.f32 %v569, %v570
    %v572 = vrot.slane %v571, 2
    %v573 = vadd.f32 %v571, %v572
    %v574 = vrot.slane %v573, 1
    %v575 = vadd.f32 %v573, %v574
    %v576 = vadd.f32 %v566, %v568
    %v577 = vrot.slane %v576, 4
    %v578 = vadd.f32 %v576, %v577
    %v579 = vrot.slane %v578, 2
    %v580 = vadd.f32 %v578, %v579
    %v581 = vrot.slane %v580, 1
    %v582 = vadd.f32 %v580, %v581
    %v583 = vld [vmem:[#allocation2] sm:$0x1]
    %585 = vset.pattern.permute.xlu0 0
    %586 = vperm.xlu0 %585, %v583
    %v587 = vpop.permute.xlu0 %586
    %v589 = vperm.slane %v587, 0
    %v590 = vadd.f32 %v575, %v589
    %v591 = vadd.f32 %v582, %v589
    %v592 = vmul.f32 %v590, 0.5
    %v593 = vmul.f32 %v591, 0.5
    %v594 = vtanh.pop %v592
    %v595 = vtanh.pop %v593
    %v596 = vadd.f32 %v594, 1.0
    %v597 = vadd.f32 %v595, 1.0
    %v598 = vmul.f32 %v596, 0.5
    %v599 = vmul.f32 %v597, 0.5
    %v602 = vrot.slane %v599, 7
    %vm603 = vcmask 1040384
    %v604 = vsel %vm603, %v598, %v602
    %v606 = vlaneseq
    %vm607 = vcmp.ge.s32.totalorder %v606, 0
    %vm608 = vcmp.lt.s32.totalorder %v606, 256
    %vm609 = vmand %vm607, %vm608
    %610 = vst.msk [vmem:[#allocation3] sm:$0x3] %vm609, %v604
    // Predicated region
    $region46: #{tpu_custom_call.1} parent=1 // pred_check
      _
    $region47: #{tpu_custom_call.1} parent=1 // pred_check_branch
      %612 = sbr.rel (0) target = $region49
    $region48: #{tpu_custom_call.1} parent=1 // pred_region
      %614 = vsyncadd [#allocation4], 0
      %s616 = sshll.u32 [#allocation3], 4
      %s617 = int_to_ptr.vmem [resolvable:$true] %s616
      %s618 = sshll.u32 %s11, 4
      %s619 = int_to_ptr.hbm [resolvable:$true] %s618
      %621 = dma.vmem_to_hbm [thread:$0]  %s617, 32, %s619, [#allocation4]
    $region49: #{tpu_custom_call.1} parent=1 // pred_fallthru
      _
    // Predicated region
    $region50: #{tpu_custom_call.1} parent=1 // pred_check
      _
    $region51: #{tpu_custom_call.1} parent=1 // pred_check_branch
      %623 = sbr.rel (0) target = $region53
    $region52: #{tpu_custom_call.1} parent=1 // pred_region
      %625 = dma.done [#allocation4], 32
    $region53: #{tpu_custom_call.1} parent=1 // pred_fallthru
      _
    %626 = vsyncpa [#allocation4], 1

</llo_original>
